<compile_context>
chip_gen: v7x
topology: tpu7x:2x2x1
jax: 0.10.0
libtpu: 0.0.40
codegen_flags: <defaults>
</compile_context>

<pallas_src>
import jax
import jax.numpy as jnp
from jax.experimental import pallas as pl
from jax.experimental.pallas import tpu as pltpu

NEG = -1e30  # additive mask value for disconnected (channel, tap) entries


# ----------------------------------------------------------------------------
# Pallas kernel: tropical (max-plus) reduction over K taps
#   p_ref : (KC, 8, TM)   patches, taps chunked by 8 on sublanes, M on lanes
#   t_ref : (KC, OCH8, 16) interleaved affine tables: [..., 2t]=A_k, [..., 2t+1]=B_k
#   o_ref : (OCH8, TM)    output, channels on sublanes, M on lanes
# For every tap k:  acc = max(acc, x + A_k, B_k - x)
#   dis channels: A = mask - w, B = mask + w   (=> |x-w| + mask)
#   uni channels: A = w + mask, B = NEG        (=>  x + w + mask)
#   padded channels / padded taps: A = B = NEG
# ----------------------------------------------------------------------------
def _disuni_kernel(p_ref, t_ref, o_ref):
    kc_count = p_ref.shape[0]
    och8, tm = o_ref.shape

    def chunk_body(kc, acc):
        xc = p_ref[kc]                        # (8, TM)   one chunk of taps
        ab = t_ref[kc]                        # (OCH8, 16) A/B pairs for chunk
        for t in range(8):                    # static 8-way unroll inside loop
            x = xc[t:t + 1, :]                # (1, TM)   sublane-broadcast row
            a = ab[:, 2 * t:2 * t + 1]        # (OCH8, 1) lane-broadcast column
            b = ab[:, 2 * t + 1:2 * t + 2]    # (OCH8, 1)
            acc = jnp.maximum(acc, x + a)     # dis(+) and uni branches
            acc = jnp.maximum(acc, b - x)     # dis(-) branch (NEG elsewhere)
        return acc

    acc0 = jnp.full((och8, tm), NEG, jnp.float32)
    acc = jax.lax.fori_loop(0, kc_count, chunk_body, acc0)
    o_ref[...] = acc.astype(o_ref.dtype)


# ----------------------------------------------------------------------------
# Glue: im2col patch extraction (plain JAX)
# ----------------------------------------------------------------------------
def _extract_patches(x, ker, stride, extra_pad):
    """x: (N, Cin, H, W) -> patches (N*Hout*Wout, Cin*kh*kw), Hout, Wout."""
    N, Cin, H, W = x.shape
    kh, kw = ker
    ph = kh // 2 + extra_pad
    pw = kw // 2 + extra_pad
    Hout = (H + 2 * ph - kh) // stride + 1
    Wout = (W + 2 * pw - kw) // stride + 1
    xp = jnp.pad(x, ((0, 0), (0, 0), (ph, ph), (pw, pw)))
    taps = []
    for i in range(kh):
        for j in range(kw):
            taps.append(xp[:, :, i:i + stride * Hout:stride, j:j + stride * Wout:stride])
    patches = jnp.stack(taps, axis=2).reshape(N, Cin * kh * kw, Hout, Wout)
    patches = patches.transpose(0, 2, 3, 1).reshape(N * Hout * Wout, Cin * kh * kw)
    return patches, Hout, Wout


# ----------------------------------------------------------------------------
# Lane-tile selection: register-resident acc, VMEM-safe, balanced grid
# ----------------------------------------------------------------------------
def _choose_tm(M, KP, och8, tm_req=2048, budget_bytes=24 << 20):
    # Cap so the fori_loop-carried (OCH8, TM) f32 accumulator stays <= ~32 vregs.
    acc_cap = max(128, ((32 * 1024) // max(och8, 8)) // 128 * 128)
    tm = min(tm_req, acc_cap)
    tm = min(tm, pl.cdiv(M, 128) * 128)        # never exceed the (padded) problem

    def vmem_bytes(t):
        # double-buffered patches + output tiles, plus the (small) table x2
        return 4 * (2 * KP * t + 2 * och8 * t) + 2 * max(KP // 8, 1) * 8 * 128 * 4

    while tm > 128 and vmem_bytes(tm) > budget_bytes:
        tm -= 128
    tm = max(tm, 128)

    # v7x megacore balance: if we need >1 step, prefer an even step count
    # (harmless on 1-TC chips; never forces a split of a single-tile problem).
    steps = pl.cdiv(M, tm)
    if steps > 1 and steps % 2 == 1:
        tm = max(128, pl.cdiv(pl.cdiv(M, steps + 1), 128) * 128)
    return tm


# ----------------------------------------------------------------------------
# Wrapper: pack affine tables + pallas_call
# ----------------------------------------------------------------------------
def disuni_forward(x, params, *, ker=(3, 3), stride=1, extra_pad=0, tm_req=2048):
    wd, md, wu, mu = params            # (och1,K), (och1,K), (och2,K), (och2,K)
    och1, K = wd.shape
    och2 = wu.shape[0]
    out_ch = och1 + och2
    och8 = pl.cdiv(out_ch, 8) * 8      # channels padded to sublane multiple
    N = x.shape[0]

    KC = pl.cdiv(K, 8)
    KP = KC * 8                        # taps padded to a multiple of 8

    # Two-affine-max tables (channels on rows/sublanes, taps on columns).
    A = jnp.full((och8, KP), NEG, jnp.float32)
    B = jnp.full((och8, KP), NEG, jnp.float32)
    A = A.at[:och1, :K].set(md - wd)               # dis: x + (m - w)
    B = B.at[:och1, :K].set(md + wd)               # dis: -x + (m + w)
    A = A.at[och1:out_ch, :K].set(wu + mu)         # uni: x + (w + m); B stays NEG
    # Interleave A/B per tap into one (KC, OCH8, 16) buffer:
    #   tab[kc, o, 2t] = A[o, kc*8+t], tab[kc, o, 2t+1] = B[o, kc*8+t]
    tab = jnp.stack([A.reshape(och8, KC, 8).transpose(1, 0, 2),
                     B.reshape(och8, KC, 8).transpose(1, 0, 2)],
                    axis=-1).reshape(KC, och8, 16)

    patches, Hout, Wout = _extract_patches(x, ker, stride, extra_pad)  # (M, K)
    M = patches.shape[0]

    tm = _choose_tm(M, KP, och8, tm_req)
    Mp = pl.cdiv(M, tm) * tm

    # Transposed patches: taps (chunked by 8) on sublanes, spatial M on lanes.
    pt = jnp.zeros((KP, Mp), jnp.float32).at[:K, :M].set(patches.T.astype(jnp.float32))
    pt = pt.reshape(KC, 8, Mp)

    out = pl.pallas_call(
        _disuni_kernel,
        out_shape=jax.ShapeDtypeStruct((och8, Mp), jnp.float32),
        grid=(Mp // tm,),
        in_specs=[
            pl.BlockSpec((KC, 8, tm), lambda i: (0, 0, i)),       # patches tile
            pl.BlockSpec((KC, och8, 16), lambda i: (0, 0, 0)),    # constant table
        ],
        out_specs=pl.BlockSpec((och8, tm), lambda i: (0, i)),
        compiler_params=pltpu.CompilerParams(
            dimension_semantics=("parallel",)),
    )(pt, tab)

    out = out[:out_ch, :M].reshape(out_ch, N, Hout, Wout).transpose(1, 0, 2, 3)
    return out  # NCHW, dis channels first then uni (matches torch.concat dim=1)


# ----------------------------------------------------------------------------
# Deterministic parameter init (matches DisUni.__init__ channel split)
# ----------------------------------------------------------------------------
def init_disuni_params(key, in_channels, out_channels, conn_dis=3, conn_uni=6,
                       ker_dis=(3, 3), ker_uni=(3, 3)):
    assert ker_dis == ker_uni, "single im2col path assumes matching kernel sizes"
    och1 = out_channels * 2 // 3
    och2 = out_channels - och1
    k1, k2 = jax.random.split(key)
    wd = 0.1 * jax.random.normal(k1, (och1, in_channels) + ker_dis, jnp.float32)
    wu = 0.1 * jax.random.normal(k2, (och2, in_channels) + ker_uni, jnp.float32)

    def make_mask(och, conn, ker):
        conn = min(conn, in_channels)
        m = jnp.full((och, in_channels), NEG, jnp.float32)
        for o in range(och):
            for j in range(conn):
                m = m.at[o, (o + j) % in_channels].set(0.0)
        return jnp.broadcast_to(m[:, :, None, None], (och, in_channels) + ker)

    md = make_mask(och1, conn_dis, ker_dis)
    mu = make_mask(och2, conn_uni, ker_uni)
    return (wd.reshape(och1, -1), md.reshape(och1, -1),
            wu.reshape(och2, -1), mu.reshape(och2, -1))


# ----------------------------------------------------------------------------
# Pure-JAX reference (same semantics, no Pallas) for correctness check
# ----------------------------------------------------------------------------
def disuni_ref(x, params, *, ker=(3, 3), stride=1, extra_pad=0):
    wd, md, wu, mu = params
    patches, Hout, Wout = _extract_patches(x, ker, stride, extra_pad)
    dis = jnp.max(jnp.abs(patches[:, None, :] - wd[None]) + md[None], axis=-1)
    uni = jnp.max(patches[:, None, :] + wu[None] + mu[None], axis=-1)
    out = jnp.concatenate([dis, uni], axis=-1)
    N = x.shape[0]
    return out.reshape(N, Hout, Wout, -1).transpose(0, 3, 1, 2)


if __name__ == "__main__":
    key = jax.random.PRNGKey(0)
    kx, kp = jax.random.split(key)

    N, Cin, H, W = 2, 4, 16, 16
    out_channels = 6

    x = jax.random.normal(kx, (N, Cin, H, W), jnp.float32)
    params = init_disuni_params(kp, Cin, out_channels)

    y = jax.block_until_ready(disuni_forward(x, params))
    y_ref = disuni_ref(x, params)

    assert y.shape == (N, out_channels, H, W), y.shape
    assert jnp.allclose(y, y_ref, atol=1e-4, rtol=1e-4), "mismatch vs reference"

    print("KERNEL_OK")
</pallas_src>

<mosaic_0001>
module attributes {stable_mosaic.version = 11 : i64} {
  func.func @_disuni_kernel(%arg0: i32, %arg1: memref<5x8x512xf32, #tpu.memory_space<vmem>>, %arg2: memref<5x8x16xf32, #tpu.memory_space<vmem>>, %arg3: memref<8x512xf32, #tpu.memory_space<vmem>>) attributes {dimension_semantics = [#tpu.dimension_semantics<parallel>], iteration_bounds = array<i64: 1>, scalar_prefetch = 0 : i64, scratch_operands = 0 : i64, tpu.core_type = #tpu.core_type<tc>, window_params = [{transform_indices = @transform_0, window_bounds = array<i64: 5, 8, 512>}, {pipeline_mode = #tpu.pipeline_mode<synchronous>, transform_indices = @transform_1, window_bounds = array<i64: 5, 8, 16>}, {transform_indices = @transform_2, window_bounds = array<i64: 8, 512>}]} {
    %cst = arith.constant -1.000000e+30 : f32
    %0 = vector.broadcast %cst : f32 to vector<8x512xf32>
    %c0_i32 = arith.constant 0 : i32
    %c5_i32 = arith.constant 5 : i32
    %1 = arith.addi %c0_i32, %c5_i32 : i32
    %c1_i32 = arith.constant 1 : i32
    %2 = scf.for %arg4 = %c0_i32 to %1 step %c1_i32 iter_args(%arg5 = %0) -> (vector<8x512xf32>)  : i32 {
      %4 = arith.index_cast %arg4 : i32 to index
      %c0_2 = arith.constant 0 : index
      %c0_3 = arith.constant 0 : index
      %5 = vector.load %arg1[%4, %c0_2, %c0_3] : memref<5x8x512xf32, #tpu.memory_space<vmem>>, vector<1x8x512xf32>
      %6 = vector.shape_cast %5 : vector<1x8x512xf32> to vector<8x512xf32>
      %7 = arith.index_cast %arg4 : i32 to index
      %c0_4 = arith.constant 0 : index
      %c0_5 = arith.constant 0 : index
      %8 = vector.load %arg2[%7, %c0_4, %c0_5] : memref<5x8x16xf32, #tpu.memory_space<vmem>>, vector<1x8x16xf32>
      %9 = vector.shape_cast %8 : vector<1x8x16xf32> to vector<8x16xf32>
      %10 = vector.extract_strided_slice %6 {offsets = [0, 0], sizes = [1, 512], strides = [1, 1]} : vector<8x512xf32> to vector<1x512xf32>
      %11 = vector.extract_strided_slice %9 {offsets = [0, 0], sizes = [8, 1], strides = [1, 1]} : vector<8x16xf32> to vector<8x1xf32>
      %12 = vector.extract_strided_slice %9 {offsets = [0, 1], sizes = [8, 1], strides = [1, 1]} : vector<8x16xf32> to vector<8x1xf32>
      %13 = vector.broadcast %10 : vector<1x512xf32> to vector<8x512xf32>
      %14 = vector.broadcast %11 : vector<8x1xf32> to vector<8x512xf32>
      %15 = arith.addf %13, %14 : vector<8x512xf32>
      %16 = arith.maximumf %arg5, %15 : vector<8x512xf32>
      %17 = vector.broadcast %12 : vector<8x1xf32> to vector<8x512xf32>
      %18 = vector.broadcast %10 : vector<1x512xf32> to vector<8x512xf32>
      %19 = arith.subf %17, %18 : vector<8x512xf32>
      %20 = arith.maximumf %16, %19 : vector<8x512xf32>
      %21 = vector.extract_strided_slice %6 {offsets = [1, 0], sizes = [1, 512], strides = [1, 1]} : vector<8x512xf32> to vector<1x512xf32>
      %22 = vector.extract_strided_slice %9 {offsets = [0, 2], sizes = [8, 1], strides = [1, 1]} : vector<8x16xf32> to vector<8x1xf32>
      %23 = vector.extract_strided_slice %9 {offsets = [0, 3], sizes = [8, 1], strides = [1, 1]} : vector<8x16xf32> to vector<8x1xf32>
      %24 = vector.broadcast %21 : vector<1x512xf32> to vector<8x512xf32>
      %25 = vector.broadcast %22 : vector<8x1xf32> to vector<8x512xf32>
      %26 = arith.addf %24, %25 : vector<8x512xf32>
      %27 = arith.maximumf %20, %26 : vector<8x512xf32>
      %28 = vector.broadcast %23 : vector<8x1xf32> to vector<8x512xf32>
      %29 = vector.broadcast %21 : vector<1x512xf32> to vector<8x512xf32>
      %30 = arith.subf %28, %29 : vector<8x512xf32>
      %31 = arith.maximumf %27, %30 : vector<8x512xf32>
      %32 = vector.extract_strided_slice %6 {offsets = [2, 0], sizes = [1, 512], strides = [1, 1]} : vector<8x512xf32> to vector<1x512xf32>
      %33 = vector.extract_strided_slice %9 {offsets = [0, 4], sizes = [8, 1], strides = [1, 1]} : vector<8x16xf32> to vector<8x1xf32>
      %34 = vector.extract_strided_slice %9 {offsets = [0, 5], sizes = [8, 1], strides = [1, 1]} : vector<8x16xf32> to vector<8x1xf32>
      %35 = vector.broadcast %32 : vector<1x512xf32> to vector<8x512xf32>
      %36 = vector.broadcast %33 : vector<8x1xf32> to vector<8x512xf32>
      %37 = arith.addf %35, %36 : vector<8x512xf32>
      %38 = arith.maximumf %31, %37 : vector<8x512xf32>
      %39 = vector.broadcast %34 : vector<8x1xf32> to vector<8x512xf32>
      %40 = vector.broadcast %32 : vector<1x512xf32> to vector<8x512xf32>
      %41 = arith.subf %39, %40 : vector<8x512xf32>
      %42 = arith.maximumf %38, %41 : vector<8x512xf32>
      %43 = vector.extract_strided_slice %6 {offsets = [3, 0], sizes = [1, 512], strides = [1, 1]} : vector<8x512xf32> to vector<1x512xf32>
      %44 = vector.extract_strided_slice %9 {offsets = [0, 6], sizes = [8, 1], strides = [1, 1]} : vector<8x16xf32> to vector<8x1xf32>
      %45 = vector.extract_strided_slice %9 {offsets = [0, 7], sizes = [8, 1], strides = [1, 1]} : vector<8x16xf32> to vector<8x1xf32>
      %46 = vector.broadcast %43 : vector<1x512xf32> to vector<8x512xf32>
      %47 = vector.broadcast %44 : vector<8x1xf32> to vector<8x512xf32>
      %48 = arith.addf %46, %47 : vector<8x512xf32>
      %49 = arith.maximumf %42, %48 : vector<8x512xf32>
      %50 = vector.broadcast %45 : vector<8x1xf32> to vector<8x512xf32>
      %51 = vector.broadcast %43 : vector<1x512xf32> to vector<8x512xf32>
      %52 = arith.subf %50, %51 : vector<8x512xf32>
      %53 = arith.maximumf %49, %52 : vector<8x512xf32>
      %54 = vector.extract_strided_slice %6 {offsets = [4, 0], sizes = [1, 512], strides = [1, 1]} : vector<8x512xf32> to vector<1x512xf32>
      %55 = vector.extract_strided_slice %9 {offsets = [0, 8], sizes = [8, 1], strides = [1, 1]} : vector<8x16xf32> to vector<8x1xf32>
      %56 = vector.extract_strided_slice %9 {offsets = [0, 9], sizes = [8, 1], strides = [1, 1]} : vector<8x16xf32> to vector<8x1xf32>
      %57 = vector.broadcast %54 : vector<1x512xf32> to vector<8x512xf32>
      %58 = vector.broadcast %55 : vector<8x1xf32> to vector<8x512xf32>
      %59 = arith.addf %57, %58 : vector<8x512xf32>
      %60 = arith.maximumf %53, %59 : vector<8x512xf32>
      %61 = vector.broadcast %56 : vector<8x1xf32> to vector<8x512xf32>
      %62 = vector.broadcast %54 : vector<1x512xf32> to vector<8x512xf32>
      %63 = arith.subf %61, %62 : vector<8x512xf32>
      %64 = arith.maximumf %60, %63 : vector<8x512xf32>
      %65 = vector.extract_strided_slice %6 {offsets = [5, 0], sizes = [1, 512], strides = [1, 1]} : vector<8x512xf32> to vector<1x512xf32>
      %66 = vector.extract_strided_slice %9 {offsets = [0, 10], sizes = [8, 1], strides = [1, 1]} : vector<8x16xf32> to vector<8x1xf32>
      %67 = vector.extract_strided_slice %9 {offsets = [0, 11], sizes = [8, 1], strides = [1, 1]} : vector<8x16xf32> to vector<8x1xf32>
      %68 = vector.broadcast %65 : vector<1x512xf32> to vector<8x512xf32>
      %69 = vector.broadcast %66 : vector<8x1xf32> to vector<8x512xf32>
      %70 = arith.addf %68, %69 : vector<8x512xf32>
      %71 = arith.maximumf %64, %70 : vector<8x512xf32>
      %72 = vector.broadcast %67 : vector<8x1xf32> to vector<8x512xf32>
      %73 = vector.broadcast %65 : vector<1x512xf32> to vector<8x512xf32>
      %74 = arith.subf %72, %73 : vector<8x512xf32>
      %75 = arith.maximumf %71, %74 : vector<8x512xf32>
      %76 = vector.extract_strided_slice %6 {offsets = [6, 0], sizes = [1, 512], strides = [1, 1]} : vector<8x512xf32> to vector<1x512xf32>
      %77 = vector.extract_strided_slice %9 {offsets = [0, 12], sizes = [8, 1], strides = [1, 1]} : vector<8x16xf32> to vector<8x1xf32>
      %78 = vector.extract_strided_slice %9 {offsets = [0, 13], sizes = [8, 1], strides = [1, 1]} : vector<8x16xf32> to vector<8x1xf32>
      %79 = vector.broadcast %76 : vector<1x512xf32> to vector<8x512xf32>
      %80 = vector.broadcast %77 : vector<8x1xf32> to vector<8x512xf32>
      %81 = arith.addf %79, %80 : vector<8x512xf32>
      %82 = arith.maximumf %75, %81 : vector<8x512xf32>
      %83 = vector.broadcast %78 : vector<8x1xf32> to vector<8x512xf32>
      %84 = vector.broadcast %76 : vector<1x512xf32> to vector<8x512xf32>
      %85 = arith.subf %83, %84 : vector<8x512xf32>
      %86 = arith.maximumf %82, %85 : vector<8x512xf32>
      %87 = vector.extract_strided_slice %6 {offsets = [7, 0], sizes = [1, 512], strides = [1, 1]} : vector<8x512xf32> to vector<1x512xf32>
      %88 = vector.extract_strided_slice %9 {offsets = [0, 14], sizes = [8, 1], strides = [1, 1]} : vector<8x16xf32> to vector<8x1xf32>
      %89 = vector.extract_strided_slice %9 {offsets = [0, 15], sizes = [8, 1], strides = [1, 1]} : vector<8x16xf32> to vector<8x1xf32>
      %90 = vector.broadcast %87 : vector<1x512xf32> to vector<8x512xf32>
      %91 = vector.broadcast %88 : vector<8x1xf32> to vector<8x512xf32>
      %92 = arith.addf %90, %91 : vector<8x512xf32>
      %93 = arith.maximumf %86, %92 : vector<8x512xf32>
      %94 = vector.broadcast %89 : vector<8x1xf32> to vector<8x512xf32>
      %95 = vector.broadcast %87 : vector<1x512xf32> to vector<8x512xf32>
      %96 = arith.subf %94, %95 : vector<8x512xf32>
      %97 = arith.maximumf %93, %96 : vector<8x512xf32>
      scf.yield %97 : vector<8x512xf32>
    }
    %c5_i32_0 = arith.constant 5 : i32
    %c0 = arith.constant 0 : index
    %c0_1 = arith.constant 0 : index
    %3 = vector.load %arg3[%c0, %c0_1] : memref<8x512xf32, #tpu.memory_space<vmem>>, vector<8x512xf32>
    tpu.vector_store %arg3[%c0, %c0_1], %2 {strides = array<i32>} : memref<8x512xf32, #tpu.memory_space<vmem>>, vector<8x512xf32>,
    return
  }
  func.func @transform_0(%arg0: i32) -> (i32, i32, i32) {
    %c0_i32 = arith.constant 0 : i32
    %c0_i32_0 = arith.constant 0 : i32
    %c0_i32_1 = arith.constant 0 : i32
    return %c0_i32, %c0_i32_0, %arg0 : i32, i32, i32
  }
  func.func @transform_1(%arg0: i32) -> (i32, i32, i32) {
    %c0_i32 = arith.constant 0 : i32
    %c0_i32_0 = arith.constant 0 : i32
    %c0_i32_1 = arith.constant 0 : i32
    %c0_i32_2 = arith.constant 0 : i32
    return %c0_i32, %c0_i32_0, %c0_i32_1 : i32, i32, i32
  }
  func.func @transform_2(%arg0: i32) -> (i32, i32) {
    %c0_i32 = arith.constant 0 : i32
    %c0_i32_0 = arith.constant 0 : i32
    return %c0_i32, %arg0 : i32, i32
  }
}

</mosaic_0001>

<llo_original>
// kernel: tpu_custom_call.1
$region0: #{tpu_custom_call.1}
  #allocation0 [shape = 'u32[]', space=smem, size = 0x4, offset = 0x4, fixed_abs, tag = 'smem constant byte address 0x4 - core index']
  #allocation1 [shape = 'u32[144,128]{1,0:T(1,128)}', space=vmem, size = 0x12000, scoped, tag = 'internal scratch']
  %s0 = inlined_call_operand.hbm [shape: f32[5,8,512], index: 0, kind: input, shape index: {}]
  %s1 = inlined_call_operand.hbm [shape: f32[5,8,16], index: 1, kind: input, shape index: {}]
  %s2 = inlined_call_operand.hbm [shape: f32[8,512], index: 2, kind: output, shape index: {}]
  %s3 = sld [smem:[#allocation0]]
  $region33: #{tpu_custom_call.1} parent=0
    _
  %s5 = ssub.s32 1, %s3
  %s6 = scalar_select 0, %s5, %s3
  $region1: #{tpu_custom_call.1} parent=0
    #allocation2 [shape = 'u8[81920]{0}', space=vmem, size = 0x14000, scoped, tag = 'input window, operand 0, single buffered']
    #allocation3 [shape = 's32[1]{0}', space=sflag, size = 0x4, scoped, tag = 'scoped memory for tpu_custom_call.1']
    #allocation4 [shape = 's32[1]{0}', space=sflag, size = 0x4, scoped, tag = 'scoped memory for tpu_custom_call.1']
    #allocation5 [shape = 'u8[20480]{0}', space=vmem, size = 0x5000, scoped, tag = 'input window, operand 1, single buffered']
    #allocation6 [shape = 's32[1]{0}', space=sflag, size = 0x4, scoped, tag = 'scoped memory for tpu_custom_call.1']
    #allocation7 [shape = 'u8[16384]{0}', space=vmem, size = 0x4000, scoped, tag = 'output window, operand 0, single buffered']
    %7 = vsyncpa [#allocation3], 0
    %8 = vsyncpa [#allocation6], 0
    %9 = vsyncpa [#allocation4], 0
    // Predicated region
    $region2: #{tpu_custom_call.1} parent=1 // pred_check
      _
    $region3: #{tpu_custom_call.1} parent=1 // pred_check_branch
      %11 = sbr.rel (0) target = $region5
    $region4: #{tpu_custom_call.1} parent=1 // pred_region
      %s13 = ssub.s32 2560, 2560
      %14 = vsyncadd [#allocation3], %s13
      %s15 = sshll.u32 [#allocation2], 4
      %s16 = int_to_ptr.vmem [resolvable:$true] %s15
      %21 = dma.hbm_to_vmem [thread:$0]  %s0, 2560, %s16, [#allocation3], 512, 512, 32
    $region5: #{tpu_custom_call.1} parent=1 // pred_fallthru
      _
    // Predicated region
    $region6: #{tpu_custom_call.1} parent=1 // pred_check
      _
    $region7: #{tpu_custom_call.1} parent=1 // pred_check_branch
      %23 = sbr.rel (0) target = $region9
    $region8: #{tpu_custom_call.1} parent=1 // pred_region
      %s25 = ssub.s32 640, 640
      %26 = vsyncadd [#allocation6], %s25
      %s27 = sshll.u32 [#allocation5], 4
      %s28 = int_to_ptr.vmem [resolvable:$true] %s27
      %33 = dma.hbm_to_vmem [thread:$0]  %s1, 640, %s28, [#allocation6], 128, 128, 8
    $region9: #{tpu_custom_call.1} parent=1 // pred_fallthru
      _
    // Predicated region
    $region10: #{tpu_custom_call.1} parent=1 // pred_check
      _
    $region11: #{tpu_custom_call.1} parent=1 // pred_check_branch
      %35 = sbr.rel (0) target = $region13
    $region12: #{tpu_custom_call.1} parent=1 // pred_region
      %36 = dma.done [#allocation3], 2560
    $region13: #{tpu_custom_call.1} parent=1 // pred_fallthru
      _
    // Predicated region
    $region14: #{tpu_custom_call.1} parent=1 // pred_check
      _
    $region15: #{tpu_custom_call.1} parent=1 // pred_check_branch
      %38 = sbr.rel (0) target = $region17
    $region16: #{tpu_custom_call.1} parent=1 // pred_region
      %39 = dma.done [#allocation6], 640
    $region17: #{tpu_custom_call.1} parent=1 // pred_fallthru
      _
    loop: start=0, step=1, limit=5
    $region18: #{tpu_custom_call.1} parent=1 // loop_pre_header
      _
    $region19: #{tpu_custom_call.1} parent=1 // loop_header
      %s41 = sphi 0, %s45
      %p42 = scmp.ge.s32.totalorder %s41, 5
      %v46 = vphi -1e+30, %v377
      %v47 = vphi -1e+30, %v378
      %v48 = vphi -1e+30, %v379
      %v49 = vphi -1e+30, %v380
    $region20: #{tpu_custom_call.1} parent=1 // loop_header_branch
      %44 = sbr.rel (%p42) target = $region24
    $region21: #{tpu_custom_call.1} parent=1 // loop_body
      %s50 = smul.u32 %s41, 4
      %s51 = smul.addr %s50, 8
      %s52 = scalar_lea.vmem [#allocation2], %s51
      %v53 = vld [vmem:[%s52] sm:$0xff]
      %v54 = vld [vmem:[%s52 + $0x8] sm:$0xff]
      %v55 = vld [vmem:[%s52 + $0x10] sm:$0xff]
      %v56 = vld [vmem:[%s52 + $0x18] sm:$0xff]
      %s57 = smul.u32 %s41, 8
      %s58 = scalar_lea.vmem [#allocation5], %s57
      %v59 = vld [vmem:[%s58] sm:$0xff]
      %v60 = vlaneseq
      %v61 = vshrl.u32 %v60, 7
      %v62 = vsub.s32 0, %v61
      %v63 = vrot.slane %v53, %v62
      %v64 = vlaneseq
      %v65 = vshrl.u32 %v64, 7
      %v66 = vsub.s32 0, %v65
      %v67 = vrot.slane %v54, %v66
      %v68 = vlaneseq
      %v69 = vshrl.u32 %v68, 7
      %v70 = vsub.s32 0, %v69
      %v71 = vrot.slane %v55, %v70
      %v72 = vlaneseq
      %v73 = vshrl.u32 %v72, 7
      %v74 = vsub.s32 0, %v73
      %v75 = vrot.slane %v56, %v74
      %77 = vset.pattern.permute.xlu0 0
      %78 = vperm.xlu0 %77, %v59
      %v79 = vpop.permute.xlu0 %78
      %v81 = vadd.f32 %v63, %v79
      %v82 = vadd.f32 %v67, %v79
      %v83 = vadd.f32 %v71, %v79
      %v84 = vadd.f32 %v75, %v79
      %v85 = vmax.f32 %v46, %v81
      %v86 = vmax.f32 %v47, %v82
      %v87 = vmax.f32 %v48, %v83
      %v88 = vmax.f32 %v49, %v84
      %89 = vset.pattern.permute.xlu0 1
      %90 = vperm.xlu0 %89, %v59
      %v91 = vpop.permute.xlu0 %90
      %v93 = vsub.f32 %v91, %v63
      %v94 = vsub.f32 %v91, %v67
      %v95 = vsub.f32 %v91, %v71
      %v96 = vsub.f32 %v91, %v75
      %v97 = vmax.f32 %v85, %v93
      %v98 = vmax.f32 %v86, %v94
      %v99 = vmax.f32 %v87, %v95
      %v100 = vmax.f32 %v88, %v96
      %v101 = vlaneseq
      %v102 = vshrl.u32 %v101, 7
      %v103 = vsub.s32 1, %v102
      %v104 = vrot.slane %v53, %v103
      %v105 = vlaneseq
      %v106 = vshrl.u32 %v105, 7
      %v107 = vsub.s32 1, %v106
      %v108 = vrot.slane %v54, %v107
      %v109 = vlaneseq
      %v110 = vshrl.u32 %v109, 7
      %v111 = vsub.s32 1, %v110
      %v112 = vrot.slane %v55, %v111
      %v113 = vlaneseq
      %v114 = vshrl.u32 %v113, 7
      %v115 = vsub.s32 1, %v114
      %v116 = vrot.slane %v56, %v115
      %117 = vset.pattern.permute.xlu0 2
      %118 = vperm.xlu0 %117, %v59
      %v119 = vpop.permute.xlu0 %118
      %v121 = vadd.f32 %v104, %v119
      %v122 = vadd.f32 %v108, %v119
      %v123 = vadd.f32 %v112, %v119
      %v124 = vadd.f32 %v116, %v119
      %v125 = vmax.f32 %v97, %v121
      %v126 = vmax.f32 %v98, %v122
      %v127 = vmax.f32 %v99, %v123
      %v128 = vmax.f32 %v100, %v124
      %129 = vset.pattern.permute.xlu0 3
      %130 = vperm.xlu0 %129, %v59
      %v131 = vpop.permute.xlu0 %130
      %v133 = vsub.f32 %v131, %v104
      %v134 = vsub.f32 %v131, %v108
      %v135 = vsub.f32 %v131, %v112
      %v136 = vsub.f32 %v131, %v116
      %v137 = vmax.f32 %v125, %v133
      %v138 = vmax.f32 %v126, %v134
      %v139 = vmax.f32 %v127, %v135
      %v140 = vmax.f32 %v128, %v136
      %v141 = vlaneseq
      %v142 = vshrl.u32 %v141, 7
      %v143 = vsub.s32 2, %v142
      %v144 = vrot.slane %v53, %v143
      %v145 = vlaneseq
      %v146 = vshrl.u32 %v145, 7
      %v147 = vsub.s32 2, %v146
      %v148 = vrot.slane %v54, %v147
      %v149 = vlaneseq
      %v150 = vshrl.u32 %v149, 7
      %v151 = vsub.s32 2, %v150
      %v152 = vrot.slane %v55, %v151
      %v153 = vlaneseq
      %v154 = vshrl.u32 %v153, 7
      %v155 = vsub.s32 2, %v154
      %v156 = vrot.slane %v56, %v155
      %157 = vset.pattern.permute.xlu0 4
      %158 = vperm.xlu0 %157, %v59
      %v159 = vpop.permute.xlu0 %158
      %v161 = vadd.f32 %v144, %v159
      %v162 = vadd.f32 %v148, %v159
      %v163 = vadd.f32 %v152, %v159
      %v164 = vadd.f32 %v156, %v159
      %v165 = vmax.f32 %v137, %v161
      %v166 = vmax.f32 %v138, %v162
      %v167 = vmax.f32 %v139, %v163
      %v168 = vmax.f32 %v140, %v164
      %169 = vset.pattern.permute.xlu0 5
      %170 = vperm.xlu0 %169, %v59
      %v171 = vpop.permute.xlu0 %170
      %v173 = vsub.f32 %v171, %v144
      %v174 = vsub.f32 %v171, %v148
      %v175 = vsub.f32 %v171, %v152
      %v176 = vsub.f32 %v171, %v156
      %v177 = vmax.f32 %v165, %v173
      %v178 = vmax.f32 %v166, %v174
      %v179 = vmax.f32 %v167, %v175
      %v180 = vmax.f32 %v168, %v176
      %v181 = vlaneseq
      %v182 = vshrl.u32 %v181, 7
      %v183 = vsub.s32 3, %v182
      %v184 = vrot.slane %v53, %v183
      %v185 = vlaneseq
      %v186 = vshrl.u32 %v185, 7
      %v187 = vsub.s32 3, %v186
      %v188 = vrot.slane %v54, %v187
      %v189 = vlaneseq
      %v190 = vshrl.u32 %v189, 7
      %v191 = vsub.s32 3, %v190
      %v192 = vrot.slane %v55, %v191
      %v193 = vlaneseq
      %v194 = vshrl.u32 %v193, 7
      %v195 = vsub.s32 3, %v194
      %v196 = vrot.slane %v56, %v195
      %197 = vset.pattern.permute.xlu0 6
      %198 = vperm.xlu0 %197, %v59
      %v199 = vpop.permute.xlu0 %198
      %v201 = vadd.f32 %v184, %v199
      %v202 = vadd.f32 %v188, %v199
      %v203 = vadd.f32 %v192, %v199
      %v204 = vadd.f32 %v196, %v199
      %v205 = vmax.f32 %v177, %v201
      %v206 = vmax.f32 %v178, %v202
      %v207 = vmax.f32 %v179, %v203
      %v208 = vmax.f32 %v180, %v204
      %209 = vset.pattern.permute.xlu0 7
      %210 = vperm.xlu0 %209, %v59
      %v211 = vpop.permute.xlu0 %210
      %v213 = vsub.f32 %v211, %v184
      %v214 = vsub.f32 %v211, %v188
      %v215 = vsub.f32 %v211, %v192
      %v216 = vsub.f32 %v211, %v196
      %v217 = vmax.f32 %v205, %v213
      %v218 = vmax.f32 %v206, %v214
      %v219 = vmax.f32 %v207, %v215
      %v220 = vmax.f32 %v208, %v216
      %v221 = vlaneseq
      %v222 = vshrl.u32 %v221, 7
      %v223 = vsub.s32 4, %v222
      %v224 = vrot.slane %v53, %v223
      %v225 = vlaneseq
      %v226 = vshrl.u32 %v225, 7
      %v227 = vsub.s32 4, %v226
      %v228 = vrot.slane %v54, %v227
      %v229 = vlaneseq
      %v230 = vshrl.u32 %v229, 7
      %v231 = vsub.s32 4, %v230
      %v232 = vrot.slane %v55, %v231
      %v233 = vlaneseq
      %v234 = vshrl.u32 %v233, 7
      %v235 = vsub.s32 4, %v234
      %v236 = vrot.slane %v56, %v235
      %237 = vset.pattern.permute.xlu0 8
      %238 = vperm.xlu0 %237, %v59
      %v239 = vpop.permute.xlu0 %238
      %v241 = vadd.f32 %v224, %v239
      %v242 = vadd.f32 %v228, %v239
      %v243 = vadd.f32 %v232, %v239
      %v244 = vadd.f32 %v236, %v239
      %v245 = vmax.f32 %v217, %v241
      %v246 = vmax.f32 %v218, %v242
      %v247 = vmax.f32 %v219, %v243
      %v248 = vmax.f32 %v220, %v244
      %249 = vset.pattern.permute.xlu0 9
      %250 = vperm.xlu0 %249, %v59
      %v251 = vpop.permute.xlu0 %250
      %v253 = vsub.f32 %v251, %v224
      %v254 = vsub.f32 %v251, %v228
      %v255 = vsub.f32 %v251, %v232
      %v256 = vsub.f32 %v251, %v236
      %v257 = vmax.f32 %v245, %v253
      %v258 = vmax.f32 %v246, %v254
      %v259 = vmax.f32 %v247, %v255
      %v260 = vmax.f32 %v248, %v256
      %v261 = vlaneseq
      %v262 = vshrl.u32 %v261, 7
      %v263 = vsub.s32 5, %v262
      %v264 = vrot.slane %v53, %v263
      %v265 = vlaneseq
      %v266 = vshrl.u32 %v265, 7
      %v267 = vsub.s32 5, %v266
      %v268 = vrot.slane %v54, %v267
      %v269 = vlaneseq
      %v270 = vshrl.u32 %v269, 7
      %v271 = vsub.s32 5, %v270
      %v272 = vrot.slane %v55, %v271
      %v273 = vlaneseq
      %v274 = vshrl.u32 %v273, 7
      %v275 = vsub.s32 5, %v274
      %v276 = vrot.slane %v56, %v275
      %277 = vset.pattern.permute.xlu0 10
      %278 = vperm.xlu0 %277, %v59
      %v279 = vpop.permute.xlu0 %278
      %v281 = vadd.f32 %v264, %v279
      %v282 = vadd.f32 %v268, %v279
      %v283 = vadd.f32 %v272, %v279
      %v284 = vadd.f32 %v276, %v279
      %v285 = vmax.f32 %v257, %v281
      %v286 = vmax.f32 %v258, %v282
      %v287 = vmax.f32 %v259, %v283
      %v288 = vmax.f32 %v260, %v284
      %289 = vset.pattern.permute.xlu0 11
      %290 = vperm.xlu0 %289, %v59
      %v291 = vpop.permute.xlu0 %290
      %v293 = vsub.f32 %v291, %v264
      %v294 = vsub.f32 %v291, %v268
      %v295 = vsub.f32 %v291, %v272
      %v296 = vsub.f32 %v291, %v276
      %v297 = vmax.f32 %v285, %v293
      %v298 = vmax.f32 %v286, %v294
      %v299 = vmax.f32 %v287, %v295
      %v300 = vmax.f32 %v288, %v296
      %v301 = vlaneseq
      %v302 = vshrl.u32 %v301, 7
      %v303 = vsub.s32 6, %v302
      %v304 = vrot.slane %v53, %v303
      %v305 = vlaneseq
      %v306 = vshrl.u32 %v305, 7
      %v307 = vsub.s32 6, %v306
      %v308 = vrot.slane %v54, %v307
      %v309 = vlaneseq
      %v310 = vshrl.u32 %v309, 7
      %v311 = vsub.s32 6, %v310
      %v312 = vrot.slane %v55, %v311
      %v313 = vlaneseq
      %v314 = vshrl.u32 %v313, 7
      %v315 = vsub.s32 6, %v314
      %v316 = vrot.slane %v56, %v315
      %317 = vset.pattern.permute.xlu0 12
      %318 = vperm.xlu0 %317, %v59
      %v319 = vpop.permute.xlu0 %318
      %v321 = vadd.f32 %v304, %v319
      %v322 = vadd.f32 %v308, %v319
      %v323 = vadd.f32 %v312, %v319
      %v324 = vadd.f32 %v316, %v319
      %v325 = vmax.f32 %v297, %v321
      %v326 = vmax.f32 %v298, %v322
      %v327 = vmax.f32 %v299, %v323
      %v328 = vmax.f32 %v300, %v324
      %329 = vset.pattern.permute.xlu0 13
      %330 = vperm.xlu0 %329, %v59
      %v331 = vpop.permute.xlu0 %330
      %v333 = vsub.f32 %v331, %v304
      %v334 = vsub.f32 %v331, %v308
      %v335 = vsub.f32 %v331, %v312
      %v336 = vsub.f32 %v331, %v316
      %v337 = vmax.f32 %v325, %v333
      %v338 = vmax.f32 %v326, %v334
      %v339 = vmax.f32 %v327, %v335
      %v340 = vmax.f32 %v328, %v336
      %v341 = vlaneseq
      %v342 = vshrl.u32 %v341, 7
      %v343 = vsub.s32 7, %v342
      %v344 = vrot.slane %v53, %v343
      %v345 = vlaneseq
      %v346 = vshrl.u32 %v345, 7
      %v347 = vsub.s32 7, %v346
      %v348 = vrot.slane %v54, %v347
      %v349 = vlaneseq
      %v350 = vshrl.u32 %v349, 7
      %v351 = vsub.s32 7, %v350
      %v352 = vrot.slane %v55, %v351
      %v353 = vlaneseq
      %v354 = vshrl.u32 %v353, 7
      %v355 = vsub.s32 7, %v354
      %v356 = vrot.slane %v56, %v355
      %357 = vset.pattern.permute.xlu0 14
      %358 = vperm.xlu0 %357, %v59
      %v359 = vpop.permute.xlu0 %358
      %v361 = vadd.f32 %v344, %v359
      %v362 = vadd.f32 %v348, %v359
      %v363 = vadd.f32 %v352, %v359
      %v364 = vadd.f32 %v356, %v359
      %v365 = vmax.f32 %v337, %v361
      %v366 = vmax.f32 %v338, %v362
      %v367 = vmax.f32 %v339, %v363
      %v368 = vmax.f32 %v340, %v364
      %369 = vset.pattern.permute.xlu0 15
      %370 = vperm.xlu0 %369, %v59
      %v371 = vpop.permute.xlu0 %370
      %v373 = vsub.f32 %v371, %v344
      %v374 = vsub.f32 %v371, %v348
      %v375 = vsub.f32 %v371, %v352
      %v376 = vsub.f32 %v371, %v356
      %v377 = vmax.f32 %v365, %v373
      %v378 = vmax.f32 %v366, %v374
      %v379 = vmax.f32 %v367, %v375
      %v380 = vmax.f32 %v368, %v376
    $region22: #{tpu_custom_call.1} parent=1 // loop_footer
      %s45 = sadd.s32 1, %s41
    $region23: #{tpu_custom_call.1} parent=1 // loop_footer_branch
      %40 = sbr.rel target = $region19
    $region24: #{tpu_custom_call.1} parent=1 // loop_exit
      _
    %381 = vst [vmem:[#allocation7] sm:$0xff] %v46
    %382 = vst [vmem:[#allocation7 + $0x8] sm:$0xff] %v47
    %383 = vst [vmem:[#allocation7 + $0x10] sm:$0xff] %v48
    %384 = vst [vmem:[#allocation7 + $0x18] sm:$0xff] %v49
    // Predicated region
    $region25: #{tpu_custom_call.1} parent=1 // pred_check
      _
    $region26: #{tpu_custom_call.1} parent=1 // pred_check_branch
      %386 = sbr.rel (0) target = $region28
    $region27: #{tpu_custom_call.1} parent=1 // pred_region
      %s388 = ssub.s32 512, 512
      %389 = vsyncadd [#allocation4], %s388
      %s391 = sshll.u32 [#allocation7], 4
      %s392 = int_to_ptr.vmem [resolvable:$true] %s391
      %394 = dma.vmem_to_hbm [thread:$0]  %s392, 512, %s2, [#allocation4]
    $region28: #{tpu_custom_call.1} parent=1 // pred_fallthru
      _
    // Predicated region
    $region29: #{tpu_custom_call.1} parent=1 // pred_check
      _
    $region30: #{tpu_custom_call.1} parent=1 // pred_check_branch
      %396 = sbr.rel (0) target = $region32
    $region31: #{tpu_custom_call.1} parent=1 // pred_region
      %397 = dma.done [#allocation4], 512
    $region32: #{tpu_custom_call.1} parent=1 // pred_fallthru
      _
    %398 = vsyncpa [#allocation3], 1
    %399 = vsyncpa [#allocation6], 1
    %400 = vsyncpa [#allocation4], 1

</llo_original>
